<compile_context>
chip_gen: v5e
topology: v5e:2x2
jax: 0.10.0
libtpu: 0.0.40
codegen_flags: <defaults>
</compile_context>

<pallas_src>
import functools

import jax
import jax.numpy as jnp
from jax.experimental import pallas as pl
from jax.experimental.pallas import tpu as pltpu


# ---------------------------------------------------------------------------
# In-kernel helpers (operate on VMEM-resident values)
# ---------------------------------------------------------------------------
def _shift_rows_down(x, k):
    """out[r] = x[r-k], zero-filled for r < k (2-D, sublane shift)."""
    return jnp.concatenate(
        [jnp.zeros((k, x.shape[1]), x.dtype), x[:-k, :]], axis=0)


def _shift_rows_up(x, k):
    """out[r] = x[r+k], zero-filled for the last k rows."""
    return jnp.concatenate(
        [x[k:, :], jnp.zeros((k, x.shape[1]), x.dtype)], axis=0)


def _overlap_add_phases(y, H, W, C):
    """Col2im for ConvT(k=4, s=2, p=1), fused on the GEMM result in VMEM.

    y: (H*W, 16*C) tap products, columns ordered (ky, kx, co).
    Returns four phase arrays p[a][b] (each (H*W, C)) with
      out[2h+a, 2w+b, c] = p[a][b][h*W + w, c].
    """
    T = [y[:, k * 4 * C:(k + 1) * 4 * C] for k in range(4)]      # per-ky blocks
    row_ev = T[1] + _shift_rows_down(T[3], W)     # output rows 2h
    row_od = T[2] + _shift_rows_up(T[0], W)       # output rows 2h+1

    r = jax.lax.broadcasted_iota(jnp.int32, (H * W, C), 0)
    w_idx = r % W
    ok_dn = w_idx != 0           # (h, w-1) neighbour exists
    ok_up = w_idx != W - 1       # (h, w+1) neighbour exists

    def col_combine(R):
        S = [R[:, k * C:(k + 1) * C] for k in range(4)]          # per-kx blocks
        ev = S[1] + jnp.where(ok_dn, _shift_rows_down(S[3], 1), 0.0)
        od = S[2] + jnp.where(ok_up, _shift_rows_up(S[0], 1), 0.0)
        return ev, od

    p00, p01 = col_combine(row_ev)
    p10, p11 = col_combine(row_od)
    return p00, p01, p10, p11


def _activate(x, act):
    if act == "relu":
        return jnp.maximum(x, 0.0)
    if act == "tanh":
        return jnp.tanh(x)
    return x


# ---------------------------------------------------------------------------
# Fused ConvT(k=4, s=2, p=1) + BN-bias + activation layer kernel
# ---------------------------------------------------------------------------
def _convt_layer_kernel(h_ref, w_ref, b_ref, o_ref, *, H, W, Cout, act):
    w = w_ref[...]               # (Cin, 16*Cout), BN scale already folded
    bias = b_ref[...]            # (1, Cout) f32
    for i in range(h_ref.shape[0]):
        y = jnp.dot(h_ref[i], w, preferred_element_type=jnp.float32)
        phases = _overlap_add_phases(y, H, W, Cout)
        outs = [_activate(p + bias, act) for p in phases]
        o_ref[i] = jnp.concatenate(outs, axis=1).astype(o_ref.dtype)


def convt_layer(h, w_mat, bias, *, H, W, Cout, act, split_batch, out_dtype):
    """h: (B, H*W, Cin); w_mat: (Cin, 16*Cout); bias: (1, Cout) f32.

    Returns the phase-blocked activation (B, H*W, 4*Cout), columns (a, b, co)."""
    B, HW, Cin = h.shape
    kern = functools.partial(_convt_layer_kernel, H=H, W=W, Cout=Cout, act=act)
    if split_batch and B > 1:
        grid, sem = (B,), ("parallel",)          # v7x: one batch elem per TC
        hb, ob = (1, HW, Cin), (1, HW, 4 * Cout)
        hmap = lambda i: (i, 0, 0)
        omap = lambda i: (i, 0, 0)
    else:
        grid, sem = (1,), ("arbitrary",)         # tiny layer: single grid step
        hb, ob = (B, HW, Cin), (B, HW, 4 * Cout)
        hmap = lambda i: (0, 0, 0)
        omap = lambda i: (0, 0, 0)
    return pl.pallas_call(
        kern,
        out_shape=jax.ShapeDtypeStruct((B, HW, 4 * Cout), out_dtype),
        grid_spec=pltpu.PrefetchScalarGridSpec(
            num_scalar_prefetch=0,
            grid=grid,
            in_specs=[
                pl.BlockSpec(hb, hmap),
                pl.BlockSpec(w_mat.shape, lambda i: (0, 0)),
                pl.BlockSpec(bias.shape, lambda i: (0, 0)),
            ],
            out_specs=pl.BlockSpec(ob, omap),
        ),
        compiler_params=pltpu.CompilerParams(dimension_semantics=sem),
    )(h, w_mat, bias)


# ---------------------------------------------------------------------------
# Head kernel: lcc mm + ConvT(emb->C1,4,1,0)+BN+ReLU + ConvT(C1->C2,4,2,1)+BN+ReLU
# ---------------------------------------------------------------------------
def _head_kernel(x_ref, bsel_ref, w1_ref, b1_ref, w2_ref, b2_ref, o_ref, h1_s,
                 *, C1, C2):
    z = jnp.dot(x_ref[...], bsel_ref[...], preferred_element_type=jnp.float32)
    y1 = jnp.dot(z, w1_ref[...], preferred_element_type=jnp.float32) + b1_ref[...]
    y1 = jnp.maximum(y1, 0.0)                    # (B, 16*C1), columns (ky, kx, co)
    w2 = w2_ref[...]
    bias2 = b2_ref[...]
    for i in range(x_ref.shape[0]):
        # (1, 16*C1) -> (16, C1): raster-ordered 4x4 layer-1 activation,
        # rearranged through a small VMEM scratch (no in-kernel reshape).
        for t in range(16):
            h1_s[t:t + 1, :] = y1[i:i + 1, t * C1:(t + 1) * C1]
        h1 = h1_s[...].astype(w2.dtype)
        y2 = jnp.dot(h1, w2, preferred_element_type=jnp.float32)   # (16, 16*C2)
        phases = _overlap_add_phases(y2, 4, 4, C2)
        outs = [jnp.maximum(p + bias2, 0.0) for p in phases]
        o_ref[i] = jnp.concatenate(outs, axis=1).astype(o_ref.dtype)


def head_layers(x, b_sel, w1_mat, b1_tiled, w2_mat, b2, *, C1, C2, out_dtype):
    B = x.shape[0]
    kern = functools.partial(_head_kernel, C1=C1, C2=C2)
    return pl.pallas_call(
        kern,
        out_shape=jax.ShapeDtypeStruct((B, 16, 4 * C2), out_dtype),
        grid_spec=pltpu.PrefetchScalarGridSpec(
            num_scalar_prefetch=0,
            grid=(1,),
            in_specs=[
                pl.BlockSpec(x.shape, lambda i: (0, 0)),
                pl.BlockSpec(b_sel.shape, lambda i: (0, 0)),
                pl.BlockSpec(w1_mat.shape, lambda i: (0, 0)),
                pl.BlockSpec(b1_tiled.shape, lambda i: (0, 0)),
                pl.BlockSpec(w2_mat.shape, lambda i: (0, 0)),
                pl.BlockSpec(b2.shape, lambda i: (0, 0)),
            ],
            out_specs=pl.BlockSpec((B, 16, 4 * C2), lambda i: (0, 0, 0)),
            scratch_shapes=[pltpu.VMEM((16, C1), jnp.float32)],
        ),
        compiler_params=pltpu.CompilerParams(dimension_semantics=("arbitrary",)),
    )(x, b_sel, w1_mat, b1_tiled, w2_mat, b2)


# ---------------------------------------------------------------------------
# XLA glue: phase-blocked (B, HW, 4C) -> NHWC (B, 2H, 2W, C)   (single tiny copy)
# ---------------------------------------------------------------------------
def phases_to_nhwc(p, H, W, C):
    B = p.shape[0]
    t = p.reshape(B, H, W, 2, 2, C).transpose(0, 1, 3, 2, 4, 5)
    return t.reshape(B, 2 * H, 2 * W, C)


def bn_scale_bias(gamma, beta, mean, var, eps=1e-5):
    scale = gamma / jnp.sqrt(var + eps)
    return scale, beta - mean * scale


def fold_convt_weight(w, scale, Cout_pad=None, dtype=jnp.bfloat16):
    """torch ConvT weight (Cin, Cout, 4, 4) -> (Cin, 16*Cout[_pad]) with the BN
    scale folded into the columns (folded in f32, then cast)."""
    Cin, Cout = w.shape[0], w.shape[1]
    wk = jnp.transpose(w, (0, 2, 3, 1)) * scale           # (Cin, ky, kx, Cout)
    if Cout_pad is not None and Cout_pad > Cout:
        wk = jnp.pad(wk, ((0, 0), (0, 0), (0, 0), (0, Cout_pad - Cout)))
        Cout = Cout_pad
    return wk.reshape(Cin, 16 * Cout).astype(dtype)


# ---------------------------------------------------------------------------
# _netG forward
# ---------------------------------------------------------------------------
def netg_forward(x, params, *, act_dtype=jnp.bfloat16):
    basis = params["basis"]                      # (basis_num, emb)
    B, sparsity = x.shape
    C1 = params["w1"].shape[1]                   # ngf*8
    C2 = params["w2"].shape[1]                   # ngf*4
    C3 = params["w3"].shape[1]                   # ngf*2
    C4 = params["w4"].shape[1]                   # ngf
    nc = params["w5"].shape[1]
    C5 = max(nc, 8)                              # pad layer-5 channels -> N=128

    # ---- lcc_sampling (eval mode): every row selects basis[0] ----
    # TODO(synk): argsort/top-k index selection stays in XLA; jnp.argsort
    # tie-breaking may differ from torch.sort on exact distance ties.
    d = jnp.sqrt(jnp.sum((basis - basis[0:1]) ** 2, axis=1))
    idx = jnp.argsort(d)[:sparsity]
    b_sel = basis[idx]                           # (sparsity, emb); scatter+mm == x @ b_sel

    # ---- fold eval-mode BN scale into the weights; bias added post overlap-add ----
    s1, b1 = bn_scale_bias(*params["bn1"])
    s2, b2 = bn_scale_bias(*params["bn2"])
    s3, b3 = bn_scale_bias(*params["bn3"])
    s4, b4 = bn_scale_bias(*params["bn4"])
    w1m = fold_convt_weight(params["w1"], s1, dtype=jnp.float32)   # layer 1 stays f32 (tiny)
    b1t = jnp.tile(b1, 16).reshape(1, 16 * C1).astype(jnp.float32)
    w2m = fold_convt_weight(params["w2"], s2, dtype=act_dtype)
    w3m = fold_convt_weight(params["w3"], s3, dtype=act_dtype)
    w4m = fold_convt_weight(params["w4"], s4, dtype=act_dtype)
    w5m = fold_convt_weight(params["w5"], jnp.ones((nc,), jnp.float32),
                            Cout_pad=C5, dtype=act_dtype)

    # ---- layers 1-2 fused (single kernel, single grid step) ----
    h = head_layers(x.astype(jnp.float32), b_sel.astype(jnp.float32),
                    w1m, b1t, w2m, b2.reshape(1, C2).astype(jnp.float32),
                    C1=C1, C2=C2, out_dtype=act_dtype)             # (B, 16, 4*C2)
    h = phases_to_nhwc(h, 4, 4, C2).reshape(B, 64, C2)

    # ---- layer 3 (tiny: single grid step) ----
    h = convt_layer(h, w3m, b3.reshape(1, C3).astype(jnp.float32),
                    H=8, W=8, Cout=C3, act="relu", split_batch=False,
                    out_dtype=act_dtype)
    h = phases_to_nhwc(h, 8, 8, C3).reshape(B, 256, C3)

    # ---- layer 4 (batch-parallel grid for v7x megacore) ----
    h = convt_layer(h, w4m, b4.reshape(1, C4).astype(jnp.float32),
                    H=16, W=16, Cout=C4, act="relu", split_batch=True,
                    out_dtype=act_dtype)
    h = phases_to_nhwc(h, 16, 16, C4).reshape(B, 1024, C4)

    # ---- layer 5 + Tanh (C_out padded 3->8; padded columns are exact zeros) ----
    h = convt_layer(h, w5m, jnp.zeros((1, C5), jnp.float32),
                    H=32, W=32, Cout=C5, act="tanh", split_batch=True,
                    out_dtype=act_dtype)
    out = phases_to_nhwc(h, 32, 32, C5)[:, :, :, :nc]              # (B, 64, 64, nc)
    return jnp.transpose(out, (0, 3, 1, 2)).astype(jnp.float32)    # NCHW


# ---------------------------------------------------------------------------
# Deterministic parameter construction (torch ConvTranspose2d weight layout)
# ---------------------------------------------------------------------------
def make_params(key, basis_num, embedding_dim, ngf, nc):
    def bn_params(k, c):
        k1, k2, k3, k4 = jax.random.split(k, 4)
        gamma = jax.random.uniform(k1, (c,), jnp.float32, 0.8, 1.2)
        beta = 0.05 * jax.random.normal(k2, (c,), jnp.float32)
        mean = 0.05 * jax.random.normal(k3, (c,), jnp.float32)
        var = jax.random.uniform(k4, (c,), jnp.float32, 0.5, 1.5)
        return gamma, beta, mean, var

    ks = jax.random.split(key, 10)
    chans = [embedding_dim, ngf * 8, ngf * 4, ngf * 2, ngf, nc]
    params = {"basis": jax.random.normal(ks[0], (basis_num, embedding_dim),
                                         jnp.float32)}
    for i in range(5):
        cin, cout = chans[i], chans[i + 1]
        params[f"w{i+1}"] = 0.05 * jax.random.normal(
            ks[1 + i], (cin, cout, 4, 4), jnp.float32)   # (C_in, C_out, kH, kW)
        if i < 4:
            params[f"bn{i+1}"] = bn_params(ks[6 + i], cout)
    return params


# Pure-XLA reference transposed conv (dilated-conv identity) for a silent
# numerics self-check of the fused GEMM + in-kernel overlap-add path.
def _convt_ref_nchw(x_nchw, w):
    w_oihw = jnp.transpose(jnp.flip(w, (2, 3)), (1, 0, 2, 3))
    return jax.lax.conv_general_dilated(
        x_nchw, w_oihw, window_strides=(1, 1), padding=((2, 2), (2, 2)),
        lhs_dilation=(2, 2), dimension_numbers=("NCHW", "OIHW", "NCHW"))


def _selfcheck_convt(dtype, tol, out_dtype):
    k = jax.random.PRNGKey(1)
    kx, kw = jax.random.split(k)
    xt = jax.random.normal(kx, (2, 8, 8, 16), jnp.float32)
    wt = 0.05 * jax.random.normal(kw, (16, 8, 4, 4), jnp.float32)
    wm = fold_convt_weight(wt, jnp.ones((8,), jnp.float32), dtype=dtype)
    got = convt_layer(xt.reshape(2, 64, 16).astype(dtype), wm,
                      jnp.zeros((1, 8), jnp.float32), H=8, W=8, Cout=8,
                      act="linear", split_batch=True, out_dtype=out_dtype)
    got = phases_to_nhwc(got, 8, 8, 8).astype(jnp.float32)
    ref = jnp.transpose(_convt_ref_nchw(jnp.transpose(xt, (0, 3, 1, 2)), wt),
                        (0, 2, 3, 1))
    rel = float(jnp.max(jnp.abs(got - ref)) / (jnp.max(jnp.abs(ref)) + 1e-9))
    assert rel < tol, f"ConvT self-check ({dtype}) failed, rel err {rel}"


if __name__ == "__main__":
    basis_num, embedding_dim, nz, ngf, nc = 16, 32, 32, 8, 3
    batch, sparsity = 2, 8

    key = jax.random.PRNGKey(0)
    kp, kx = jax.random.split(key)
    params = make_params(kp, basis_num, embedding_dim, ngf, nc)
    x = jax.random.normal(kx, (batch, sparsity), jnp.float32)

    # --- silent correctness self-checks of one fused ConvT block ---
    _selfcheck_convt(jnp.float32, 1e-2, jnp.float32)     # structural / f32 path
    _selfcheck_convt(jnp.bfloat16, 5e-2, jnp.bfloat16)   # production bf16 path

    # --- full forward ---
    fwd = jax.jit(lambda xx: netg_forward(xx, params))
    out = jax.block_until_ready(fwd(x))

    assert out.shape == (batch, nc, 64, 64), out.shape
    assert bool(jnp.all(jnp.isfinite(out)))
    assert bool(jnp.all(jnp.abs(out) <= 1.0 + 1e-6))     # tanh range
    print("KERNEL_OK")
</pallas_src>

<mosaic_0001>
module attributes {stable_mosaic.version = 11 : i64} {
  func.func @_convt_layer_kernel(%arg0: i32, %arg1: memref<1x64x16xf32, #tpu.memory_space<vmem>>, %arg2: memref<16x128xf32, #tpu.memory_space<vmem>>, %arg3: memref<1x8xf32, #tpu.memory_space<vmem>>, %arg4: memref<1x64x32xf32, #tpu.memory_space<vmem>>) attributes {dimension_semantics = [#tpu.dimension_semantics<parallel>], iteration_bounds = array<i64: 2>, scalar_prefetch = 0 : i64, scratch_operands = 0 : i64, tpu.core_type = #tpu.core_type<tc>, window_params = [{transform_indices = @transform_0, window_bounds = array<i64: 1, 64, 16>}, {pipeline_mode = #tpu.pipeline_mode<synchronous>, transform_indices = @transform_1, window_bounds = array<i64: 16, 128>}, {pipeline_mode = #tpu.pipeline_mode<synchronous>, transform_indices = @transform_2, window_bounds = array<i64: 1, 8>}, {transform_indices = @transform_3, window_bounds = array<i64: 1, 64, 32>}]} {
    %c0 = arith.constant 0 : index
    %c0_0 = arith.constant 0 : index
    %0 = vector.load %arg2[%c0, %c0_0] : memref<16x128xf32, #tpu.memory_space<vmem>>, vector<16x128xf32>
    %c0_1 = arith.constant 0 : index
    %c0_2 = arith.constant 0 : index
    %1 = vector.load %arg3[%c0_1, %c0_2] : memref<1x8xf32, #tpu.memory_space<vmem>>, vector<1x8xf32>
    %c0_3 = arith.constant 0 : index
    %c0_4 = arith.constant 0 : index
    %c0_5 = arith.constant 0 : index
    %2 = vector.load %arg1[%c0_3, %c0_4, %c0_5] : memref<1x64x16xf32, #tpu.memory_space<vmem>>, vector<1x64x16xf32>
    %3 = vector.shape_cast %2 : vector<1x64x16xf32> to vector<64x16xf32>
    %cst = arith.constant dense<0.000000e+00> : vector<64x128xf32>
    %4 = tpu.matmul %3, %0, %cst {dimension_numbers = #tpu.dot_dimension_numbers<[1], [0], [0], [1], [0, 0, 1, 1], [], []>} : vector<64x16xf32>, vector<16x128xf32>, vector<64x128xf32> -> vector<64x128xf32>
    %5 = vector.extract_strided_slice %4 {offsets = [0, 0], sizes = [64, 32], strides = [1, 1]} : vector<64x128xf32> to vector<64x32xf32>
    %6 = vector.extract_strided_slice %4 {offsets = [0, 32], sizes = [64, 32], strides = [1, 1]} : vector<64x128xf32> to vector<64x32xf32>
    %7 = vector.extract_strided_slice %4 {offsets = [0, 64], sizes = [64, 32], strides = [1, 1]} : vector<64x128xf32> to vector<64x32xf32>
    %8 = vector.extract_strided_slice %4 {offsets = [0, 96], sizes = [64, 32], strides = [1, 1]} : vector<64x128xf32> to vector<64x32xf32>
    %cst_6 = arith.constant 0.000000e+00 : f32
    %9 = vector.broadcast %cst_6 : f32 to vector<8x32xf32>
    %10 = vector.extract_strided_slice %8 {offsets = [0, 0], sizes = [56, 32], strides = [1, 1]} : vector<64x32xf32> to vector<56x32xf32>
    %11 = tpu.concatenate %9, %10 in 0 : vector<8x32xf32>, vector<56x32xf32> -> vector<64x32xf32>
    %12 = arith.addf %6, %11 : vector<64x32xf32>
    %13 = vector.extract_strided_slice %5 {offsets = [8, 0], sizes = [56, 32], strides = [1, 1]} : vector<64x32xf32> to vector<56x32xf32>
    %cst_7 = arith.constant 0.000000e+00 : f32
    %14 = vector.broadcast %cst_7 : f32 to vector<8x32xf32>
    %15 = tpu.concatenate %13, %14 in 0 : vector<56x32xf32>, vector<8x32xf32> -> vector<64x32xf32>
    %16 = arith.addf %7, %15 : vector<64x32xf32>
    %17 = tpu.iota {dimensions = array<i32: 0>} : vector<64x8xi32>
    %c8_i32 = arith.constant 8 : i32
    %c0_i32 = arith.constant 0 : i32
    %18 = arith.cmpi eq, %c8_i32, %c0_i32 : i32
    %c1_i32 = arith.constant 1 : i32
    %19 = arith.select %18, %c1_i32, %c8_i32 : i32
    %20 = vector.broadcast %19 : i32 to vector<64x8xi32>
    %21 = arith.remsi %17, %20 : vector<64x8xi32>
    %c0_i32_8 = arith.constant 0 : i32
    %22 = vector.broadcast %c0_i32_8 : i32 to vector<64x8xi32>
    %23 = arith.cmpi ne, %21, %22 : vector<64x8xi32>
    %c0_i32_9 = arith.constant 0 : i32
    %24 = vector.broadcast %c0_i32_9 : i32 to vector<64x8xi32>
    %25 = arith.cmpi slt, %21, %24 : vector<64x8xi32>
    %c0_i32_10 = arith.constant 0 : i32
    %26 = arith.cmpi slt, %19, %c0_i32_10 : i32
    %27 = vector.broadcast %26 : i1 to vector<64x8xi1>
    %28 = vector.broadcast %27 : vector<64x8xi1> to vector<64x8xi1>
    %29 = arith.xori %25, %28 : vector<64x8xi1>
    %30 = arith.andi %29, %23 : vector<64x8xi1>
    %31 = vector.broadcast %19 : i32 to vector<64x8xi32>
    %32 = arith.addi %21, %31 : vector<64x8xi32>
    %33 = arith.select %30, %32, %21 : vector<64x8xi1>, vector<64x8xi32>
    %c0_i32_11 = arith.constant 0 : i32
    %34 = vector.broadcast %c0_i32_11 : i32 to vector<64x8xi32>
    %35 = arith.cmpi ne, %33, %34 : vector<64x8xi32>
    %c7_i32 = arith.constant 7 : i32
    %36 = vector.broadcast %c7_i32 : i32 to vector<64x8xi32>
    %37 = arith.cmpi ne, %33, %36 : vector<64x8xi32>
    %38 = vector.extract_strided_slice %12 {offsets = [0, 0], sizes = [64, 8], strides = [1, 1]} : vector<64x32xf32> to vector<64x8xf32>
    %39 = vector.extract_strided_slice %12 {offsets = [0, 8], sizes = [64, 8], strides = [1, 1]} : vector<64x32xf32> to vector<64x8xf32>
    %40 = vector.extract_strided_slice %12 {offsets = [0, 16], sizes = [64, 8], strides = [1, 1]} : vector<64x32xf32> to vector<64x8xf32>
    %41 = vector.extract_strided_slice %12 {offsets = [0, 24], sizes = [64, 8], strides = [1, 1]} : vector<64x32xf32> to vector<64x8xf32>
    %cst_12 = arith.constant 0.000000e+00 : f32
    %42 = vector.broadcast %cst_12 : f32 to vector<1x8xf32>
    %43 = vector.extract_strided_slice %41 {offsets = [0, 0], sizes = [63, 8], strides = [1, 1]} : vector<64x8xf32> to vector<63x8xf32>
    %44 = tpu.concatenate %42, %43 in 0 : vector<1x8xf32>, vector<63x8xf32> -> vector<64x8xf32>
    %cst_13 = arith.constant 0.000000e+00 : f32
    %45 = vector.broadcast %cst_13 : f32 to vector<64x8xf32>
    %46 = arith.select %35, %44, %45 : vector<64x8xi1>, vector<64x8xf32>
    %47 = arith.addf %39, %46 : vector<64x8xf32>
    %48 = vector.extract_strided_slice %38 {offsets = [1, 0], sizes = [63, 8], strides = [1, 1]} : vector<64x8xf32> to vector<63x8xf32>
    %cst_14 = arith.constant 0.000000e+00 : f32
    %49 = vector.broadcast %cst_14 : f32 to vector<1x8xf32>
    %50 = tpu.concatenate %48, %49 in 0 : vector<63x8xf32>, vector<1x8xf32> -> vector<64x8xf32>
    %cst_15 = arith.constant 0.000000e+00 : f32
    %51 = vector.broadcast %cst_15 : f32 to vector<64x8xf32>
    %52 = arith.select %37, %50, %51 : vector<64x8xi1>, vector<64x8xf32>
    %53 = arith.addf %40, %52 : vector<64x8xf32>
    %54 = vector.extract_strided_slice %16 {offsets = [0, 0], sizes = [64, 8], strides = [1, 1]} : vector<64x32xf32> to vector<64x8xf32>
    %55 = vector.extract_strided_slice %16 {offsets = [0, 8], sizes = [64, 8], strides = [1, 1]} : vector<64x32xf32> to vector<64x8xf32>
    %56 = vector.extract_strided_slice %16 {offsets = [0, 16], sizes = [64, 8], strides = [1, 1]} : vector<64x32xf32> to vector<64x8xf32>
    %57 = vector.extract_strided_slice %16 {offsets = [0, 24], sizes = [64, 8], strides = [1, 1]} : vector<64x32xf32> to vector<64x8xf32>
    %cst_16 = arith.constant 0.000000e+00 : f32
    %58 = vector.broadcast %cst_16 : f32 to vector<1x8xf32>
    %59 = vector.extract_strided_slice %57 {offsets = [0, 0], sizes = [63, 8], strides = [1, 1]} : vector<64x8xf32> to vector<63x8xf32>
    %60 = tpu.concatenate %58, %59 in 0 : vector<1x8xf32>, vector<63x8xf32> -> vector<64x8xf32>
    %cst_17 = arith.constant 0.000000e+00 : f32
    %61 = vector.broadcast %cst_17 : f32 to vector<64x8xf32>
    %62 = arith.select %35, %60, %61 : vector<64x8xi1>, vector<64x8xf32>
    %63 = arith.addf %55, %62 : vector<64x8xf32>
    %64 = vector.extract_strided_slice %54 {offsets = [1, 0], sizes = [63, 8], strides = [1, 1]} : vector<64x8xf32> to vector<63x8xf32>
    %cst_18 = arith.constant 0.000000e+00 : f32
    %65 = vector.broadcast %cst_18 : f32 to vector<1x8xf32>
    %66 = tpu.concatenate %64, %65 in 0 : vector<63x8xf32>, vector<1x8xf32> -> vector<64x8xf32>
    %cst_19 = arith.constant 0.000000e+00 : f32
    %67 = vector.broadcast %cst_19 : f32 to vector<64x8xf32>
    %68 = arith.select %37, %66, %67 : vector<64x8xi1>, vector<64x8xf32>
    %69 = arith.addf %56, %68 : vector<64x8xf32>
    %70 = vector.broadcast %1 : vector<1x8xf32> to vector<64x8xf32>
    %71 = arith.addf %47, %70 : vector<64x8xf32>
    %72 = vector.broadcast %1 : vector<1x8xf32> to vector<64x8xf32>
    %73 = arith.addf %53, %72 : vector<64x8xf32>
    %74 = vector.broadcast %1 : vector<1x8xf32> to vector<64x8xf32>
    %75 = arith.addf %63, %74 : vector<64x8xf32>
    %76 = vector.broadcast %1 : vector<1x8xf32> to vector<64x8xf32>
    %77 = arith.addf %69, %76 : vector<64x8xf32>
    %78 = tpu.concatenate %71, %73, %75, %77 in 1 : vector<64x8xf32>, vector<64x8xf32>, vector<64x8xf32>, vector<64x8xf32> -> vector<64x32xf32>
    %c0_20 = arith.constant 0 : index
    %c0_21 = arith.constant 0 : index
    %c0_22 = arith.constant 0 : index
    %79 = vector.load %arg4[%c0_20, %c0_21, %c0_22] : memref<1x64x32xf32, #tpu.memory_space<vmem>>, vector<1x64x32xf32>
    %80 = vector.shape_cast %79 : vector<1x64x32xf32> to vector<64x32xf32>
    %81 = vector.shape_cast %78 : vector<64x32xf32> to vector<1x64x32xf32>
    tpu.vector_store %arg4[%c0_20, %c0_21, %c0_22], %81 {strides = array<i32>} : memref<1x64x32xf32, #tpu.memory_space<vmem>>, vector<1x64x32xf32>,
    return
  }
  func.func @transform_0(%arg0: i32) -> (i32, i32, i32) {
    %c0_i32 = arith.constant 0 : i32
    %c0_i32_0 = arith.constant 0 : i32
    %c0_i32_1 = arith.constant 0 : i32
    return %arg0, %c0_i32, %c0_i32_0 : i32, i32, i32
  }
  func.func @transform_1(%arg0: i32) -> (i32, i32) {
    %c0_i32 = arith.constant 0 : i32
    %c0_i32_0 = arith.constant 0 : i32
    %c0_i32_1 = arith.constant 0 : i32
    return %c0_i32, %c0_i32_0 : i32, i32
  }
  func.func @transform_2(%arg0: i32) -> (i32, i32) {
    %c0_i32 = arith.constant 0 : i32
    %c0_i32_0 = arith.constant 0 : i32
    %c0_i32_1 = arith.constant 0 : i32
    return %c0_i32, %c0_i32_0 : i32, i32
  }
  func.func @transform_3(%arg0: i32) -> (i32, i32, i32) {
    %c0_i32 = arith.constant 0 : i32
    %c0_i32_0 = arith.constant 0 : i32
    %c0_i32_1 = arith.constant 0 : i32
    return %arg0, %c0_i32, %c0_i32_0 : i32, i32, i32
  }
}

</mosaic_0001>

<llo_original>
// kernel: tpu_custom_call.1
$region0: #{tpu_custom_call.1}
  #allocation0 [shape = 'u32[]', space=smem, size = 0x4, offset = 0x4, fixed_abs, tag = 'smem constant byte address 0x4 - core index']
  #allocation1 [shape = 'u32[72,128]{1,0:T(1,128)}', space=vmem, size = 0x9000, scoped, tag = 'internal scratch']
  %s0 = inlined_call_operand.vmem [shape: f32[2,64,16], index: 0, kind: input, shape index: {}]
  %s1 = inlined_call_operand.vmem [shape: f32[16,128], index: 1, kind: input, shape index: {}]
  %s2 = inlined_call_operand.vmem [shape: f32[1,8], index: 2, kind: input, shape index: {}]
  %s3 = inlined_call_operand.vmem [shape: f32[2,64,32], index: 3, kind: output, shape index: {}]
  %s4 = sld [smem:[#allocation0]]
  $region45: #{tpu_custom_call.1} parent=0
    _
  %s6 = ssub.s32 1, %s4
  %s7 = scalar_select 0, %s6, %s4
  loop: start=0, step=1, limit=4
  $region2: #{tpu_custom_call.1} parent=0 // loop_pre_header
    _
  $region3: #{tpu_custom_call.1} parent=0 // loop_header
    %s9 = sphi 0, %s13
    %p10 = scmp.ge.s32.totalorder %s9, 4
    %s19 = sphi 0, %s21
    %s22 = sphi 0, %s19
    %s23 = sphi 0, %s22
    %s39 = sphi 0, %s23
    %s43 = sphi 0, %s43
    %s45 = sphi 0, %s43
    %s46 = sphi 0, %s45
    %s60 = sphi 0, %s46
    %s64 = sphi 0, %s64
    %s66 = sphi 0, %s64
    %s67 = sphi 0, %s66
    %s81 = sphi 0, %s67
    %s87 = sphi 0, %s89
    %s90 = sphi 0, %s87
    %s91 = sphi 0, %s90
    %s107 = sphi 0, %s91
  $region4: #{tpu_custom_call.1} parent=0 // loop_header_branch
    %12 = sbr.rel (%p10) target = $region8
  $region5: #{tpu_custom_call.1} parent=0 // loop_body
    %s14 = ssub.s32 %s9, 1
    %s15 = ssub.s32 %s9, 2
    %s16 = sadd.s32 %s9, 1
    %s17 = ssub.s32 %s9, %s16
    %p18 = scmp.eq.s32.totalorder %s17, 0
    %s20 = sadd.s32 %s19, 1
    %s21 = scalar_select %p18, %s19, %s20
    %p24 = pneg %p18
    %p25 = scmp.eq.s32.totalorder %s9, 1
    %p26 = por %p24, %p25
    %p27 = scmp.ne.s32.totalorder %s19, %s22
    %p28 = scmp.eq.s32.totalorder %s9, 0
    %p29 = por %p27, %p28
    %p30 = scmp.ne.s32.totalorder %s19, %s22
    %p31 = scmp.eq.s32.totalorder %s14, 1
    %p32 = por %p30, %p31
    %p33 = scmp.ne.s32.totalorder %s22, %s23
    %p34 = scmp.eq.s32.totalorder %s14, 0
    %p35 = por %p33, %p34
    %p36 = scmp.ne.s32.totalorder %s22, %s23
    %p37 = scmp.eq.s32.totalorder %s15, 1
    %p38 = por %p36, %p37
    %p40 = scmp.ne.s32.totalorder %s23, %s39
    %p41 = scmp.eq.s32.totalorder %s15, 0
    %p42 = por %p40, %p41
    %s44 = sadd.s32 %s43, 1
    %p47 = scmp.eq.s32.totalorder %s9, 1
    %p48 = scmp.ne.s32.totalorder %s43, %s45
    %p49 = scmp.eq.s32.totalorder %s9, 0
    %p50 = por %p48, %p49
    %p51 = scmp.ne.s32.totalorder %s43, %s45
    %p52 = scmp.eq.s32.totalorder %s14, 1
    %p53 = por %p51, %p52
    %p54 = scmp.ne.s32.totalorder %s45, %s46
    %p55 = scmp.eq.s32.totalorder %s14, 0
    %p56 = por %p54, %p55
    %p57 = scmp.ne.s32.totalorder %s45, %s46
    %p58 = scmp.eq.s32.totalorder %s15, 1
    %p59 = por %p57, %p58
    %p61 = scmp.ne.s32.totalorder %s46, %s60
    %p62 = scmp.eq.s32.totalorder %s15, 0
    %p63 = por %p61, %p62
    %s65 = sadd.s32 %s64, 1
    %p68 = scmp.eq.s32.totalorder %s9, 1
    %p69 = scmp.ne.s32.totalorder %s64, %s66
    %p70 = scmp.eq.s32.totalorder %s9, 0
    %p71 = por %p69, %p70
    %p72 = scmp.ne.s32.totalorder %s64, %s66
    %p73 = scmp.eq.s32.totalorder %s14, 1
    %p74 = por %p72, %p73
    %p75 = scmp.ne.s32.totalorder %s66, %s67
    %p76 = scmp.eq.s32.totalorder %s14, 0
    %p77 = por %p75, %p76
    %p78 = scmp.ne.s32.totalorder %s66, %s67
    %p79 = scmp.eq.s32.totalorder %s15, 1
    %p80 = por %p78, %p79
    %p82 = scmp.ne.s32.totalorder %s67, %s81
    %p83 = scmp.eq.s32.totalorder %s15, 0
    %p84 = por %p82, %p83
    %s85 = ssub.s32 %s9, %s16
    %p86 = scmp.eq.s32.totalorder %s85, 0
    %s88 = sadd.s32 %s87, 1
    %s89 = scalar_select %p86, %s87, %s88
    %p92 = pneg %p86
    %p93 = scmp.eq.s32.totalorder %s9, 1
    %p94 = por %p92, %p93
    %p95 = scmp.ne.s32.totalorder %s87, %s90
    %p96 = scmp.eq.s32.totalorder %s9, 0
    %p97 = por %p95, %p96
    %p98 = scmp.ne.s32.totalorder %s87, %s90
    %p99 = scmp.eq.s32.totalorder %s14, 1
    %p100 = por %p98, %p99
    %p101 = scmp.ne.s32.totalorder %s90, %s91
    %p102 = scmp.eq.s32.totalorder %s14, 0
    %p103 = por %p101, %p102
    %p104 = scmp.ne.s32.totalorder %s90, %s91
    %p105 = scmp.eq.s32.totalorder %s15, 1
    %p106 = por %p104, %p105
    %p108 = scmp.ne.s32.totalorder %s91, %s107
    %p109 = scmp.eq.s32.totalorder %s15, 0
    %p110 = por %p108, %p109
    %p111 = scmp.le.s32.totalorder 1, %s9
    %p112 = scmp.lt.s32.totalorder %s9, 3
    %p113 = pnand %p111, %p112
    %p114 = pneg %p113
    // Predicated region
    $region9: #{tpu_custom_call.1} parent=5 // pred_check
      _
    $region10: #{tpu_custom_call.1} parent=5 // pred_check_branch
      %116 = sbr.rel (%p113) target = $region12
    $region11: #{tpu_custom_call.1} parent=5 // pred_region
      %s117 = ssub.s32 %s9, 1
      // Predicated region
      $region13: #{tpu_custom_call.1} parent=11 // pred_check
        %p118 = pneg %p56
      $region14: #{tpu_custom_call.1} parent=11 // pred_check_branch
        %120 = sbr.rel (%p118) target = $region16
      $region15: #{tpu_custom_call.1} parent=11 // pred_region
        _
      $region16: #{tpu_custom_call.1} parent=11 // pred_fallthru
        _
      // Predicated region
      $region17: #{tpu_custom_call.1} parent=11 // pred_check
        %p121 = pneg %p77
      $region18: #{tpu_custom_call.1} parent=11 // pred_check_branch
        %123 = sbr.rel (%p121) target = $region20
      $region19: #{tpu_custom_call.1} parent=11 // pred_region
        _
      $region20: #{tpu_custom_call.1} parent=11 // pred_fallthru
        _
    $region12: #{tpu_custom_call.1} parent=5 // pred_fallthru
      _
    %p124 = scmp.lt.s32.totalorder %s9, 2
    // Predicated region
    $region21: #{tpu_custom_call.1} parent=5 // pred_check
      %p125 = pneg %p124
    $region22: #{tpu_custom_call.1} parent=5 // pred_check_branch
      %127 = sbr.rel (%p125) target = $region24
    $region23: #{tpu_custom_call.1} parent=5 // pred_region
      // Predicated region
      $region25: #{tpu_custom_call.1} parent=23 // pred_check
        %p128 = pneg %p29
      $region26: #{tpu_custom_call.1} parent=23 // pred_check_branch
        %130 = sbr.rel (%p128) target = $region28
      $region27: #{tpu_custom_call.1} parent=23 // pred_region
        %p131 = scmp.lt.s32.totalorder %s9, 1
        %s132 = scalar_select %p131, %s9, 1
        %s133 = smul.addr %s132, 8
        %s134 = smul.addr %s133, 8
        %s135 = scalar_lea.vmem %s0, %s134
      $region28: #{tpu_custom_call.1} parent=23 // pred_fallthru
        _
    $region24: #{tpu_custom_call.1} parent=5 // pred_fallthru
      _
    %p136 = scmp.le.s32.totalorder 1, %s9
    %p137 = scmp.lt.s32.totalorder %s9, 3
    %p138 = pnand %p136, %p137
    %p139 = pneg %p138
    // Predicated region
    $region29: #{tpu_custom_call.1} parent=5 // pred_check
      _
    $region30: #{tpu_custom_call.1} parent=5 // pred_check_branch
      %141 = sbr.rel (%p138) target = $region32
    $region31: #{tpu_custom_call.1} parent=5 // pred_region
      %s142 = ssub.s32 %s9, 1
      %p143 = scmp.lt.s32.totalorder %s14, 1
      %s144 = scalar_select %p143, %s14, 1
      %s145 = smul.addr %s144, 8
      %s146 = smul.addr %s145, 8
      %s147 = scalar_lea.vmem %s0, %s146
      %p148 = pneg %p35
      %p149 = pneg %p32
      %p150 = pneg %p56
      %p151 = pneg %p53
      %p152 = pneg %p77
      %p153 = pneg %p74
      %p154 = pneg %p103
      %p155 = pneg %p100
      %p156 = scmp.lt.s32.totalorder %s14, 1
      %s157 = scalar_select %p156, %s14, 1
      %s158 = smul.addr %s157, 8
      %s159 = smul.addr %s158, 8
      %s160 = scalar_lea.vmem %s3, %s159
      %p161 = scmp.lt.s32.totalorder %s14, 1
      %s162 = scalar_select %p161, %s14, 1
      %s163 = smul.addr %s162, 8
      %s164 = smul.addr %s163, 8
      %s165 = scalar_lea.vmem %s0, %s164
      %p166 = scmp.lt.s32.totalorder %s14, 1
      %s167 = scalar_select %p166, %s14, 1
      %s168 = smul.addr %s167, 8
      %s169 = smul.addr %s168, 8
      %s170 = scalar_lea.vmem %s3, %s169
      %v171 = vld [vmem:[%s1] sm:$0xff]
      %v172 = vld [vmem:[%s1 + $0x8] sm:$0xff]
      %v173 = vld [vmem:[%s2] sm:$0x1]
      %v174 = vld [vmem:[%s165] sm:$0xff]
      %v175 = vld [vmem:[%s165 + $0x8] sm:$0xff]
      %v176 = vld [vmem:[%s165 + $0x10] sm:$0xff]
      %v177 = vld [vmem:[%s165 + $0x18] sm:$0xff]
      %v178 = vld [vmem:[%s165 + $0x20] sm:$0xff]
      %v179 = vld [vmem:[%s165 + $0x28] sm:$0xff]
      %v180 = vld [vmem:[%s165 + $0x30] sm:$0xff]
      %v181 = vld [vmem:[%s165 + $0x38] sm:$0xff]
      %vm182 = vcmask 130048
      %v184 = vsel %vm182, %v174, 0
      %v187 = vsel %vm182, %v175, 0
      %v190 = vsel %vm182, %v176, 0
      %v193 = vsel %vm182, %v177, 0
      %v196 = vsel %vm182, %v178, 0
      %v199 = vsel %vm182, %v179, 0
      %v202 = vsel %vm182, %v180, 0
      %v205 = vsel %vm182, %v181, 0
      %207 = vmatpush.msra.mxu0 0.0
      %208 = vmatpush.msra.mxu0 0.0
      %209 = vmatpush.msra.mxu0 0.0
      %210 = vmatpush.msra.mxu0 0.0
      %211 = vmatpush.msra.mxu0 0.0
      %212 = vmatpush.msra.mxu0 0.0
      %213 = vmatpush.msra.mxu0 0.0
      %214 = vmatpush.msra.mxu0 0.0
      %215 = vmatpush.msra.mxu0 0.0
      %216 = vmatpush.msra.mxu0 0.0
      %217 = vmatpush.msra.mxu0 0.0
      %218 = vmatpush.msra.mxu0 0.0
      %219 = vmatpush.msra.mxu0 0.0
      %220 = vmatpush.msra.mxu0 0.0
      %221 = vmatpush.msra.mxu0 %v172
      %222 = vmatpush.msra.mxu0 %v171
      %223 = vmatmul.f32.gmra.mxu0 %v184
      %v224 = vpop.f32.mrf.mxu0
      %v225 = vadd.f32 0.0, %v224
      %226 = vmatmul.f32.gmra.mxu0 %v187
      %v227 = vpop.f32.mrf.mxu0
      %v228 = vadd.f32 0.0, %v227
      %229 = vmatmul.f32.gmra.mxu0 %v190
      %v230 = vpop.f32.mrf.mxu0
      %v231 = vadd.f32 0.0, %v230
      %232 = vmatmul.f32.gmra.mxu0 %v193
      %v233 = vpop.f32.mrf.mxu0
      %v234 = vadd.f32 0.0, %v233
      %235 = vmatmul.f32.gmra.mxu0 %v196
      %v236 = vpop.f32.mrf.mxu0
      %v237 = vadd.f32 0.0, %v236
      %238 = vmatmul.f32.gmra.mxu0 %v199
      %v239 = vpop.f32.mrf.mxu0
      %v240 = vadd.f32 0.0, %v239
      %241 = vmatmul.f32.gmra.mxu0 %v202
      %v242 = vpop.f32.mrf.mxu0
      %v243 = vadd.f32 0.0, %v242
      %244 = vmatmul.f32.gmra.mxu0 %v205
      %v245 = vpop.f32.mrf.mxu0
      %v246 = vadd.f32 0.0, %v245
      %247 = vdwg.mxu0
      %255 = vrot.lane.b32.xlu0 %v225, 32
      %v256 = vpop.permute.xlu0 %255
      %257 = vrot.lane.b32.xlu0 %v228, 32
      %v258 = vpop.permute.xlu0 %257
      %259 = vrot.lane.b32.xlu0 %v231, 32
      %v260 = vpop.permute.xlu0 %259
      %261 = vrot.lane.b32.xlu0 %v234, 32
      %v262 = vpop.permute.xlu0 %261
      %263 = vrot.lane.b32.xlu0 %v237, 32
      %v264 = vpop.permute.xlu0 %263
      %265 = vrot.lane.b32.xlu0 %v240, 32
      %v266 = vpop.permute.xlu0 %265
      %267 = vrot.lane.b32.xlu0 %v243, 32
      %v268 = vpop.permute.xlu0 %267
      %270 = vrot.lane.b32.xlu0 0.0, 32
      %v271 = vpop.permute.xlu0 %270
      %272 = vrot.lane.b32.xlu0 %v256, 32
      %v273 = vpop.permute.xlu0 %272
      %274 = vrot.lane.b32.xlu0 %v258, 32
      %v275 = vpop.permute.xlu0 %274
      %276 = vrot.lane.b32.xlu0 %v260, 32
      %v277 = vpop.permute.xlu0 %276
      %278 = vrot.lane.b32.xlu0 %v262, 32
      %v279 = vpop.permute.xlu0 %278
      %280 = vrot.lane.b32.xlu0 %v264, 32
      %v281 = vpop.permute.xlu0 %280
      %282 = vrot.lane.b32.xlu0 %v266, 32
      %v283 = vpop.permute.xlu0 %282
      %284 = vrot.lane.b32.xlu0 %v268, 32
      %v285 = vpop.permute.xlu0 %284
      %v294 = vadd.f32 %v225, %v271
      %v295 = vadd.f32 %v228, %v273
      %v296 = vadd.f32 %v231, %v275
      %v297 = vadd.f32 %v234, %v277
      %v298 = vadd.f32 %v237, %v279
      %v299 = vadd.f32 %v240, %v281
      %v300 = vadd.f32 %v243, %v283
      %v301 = vadd.f32 %v246, %v285
      %303 = vrot.lane.b32.xlu0 %v228, 64
      %v304 = vpop.permute.xlu0 %303
      %305 = vrot.lane.b32.xlu0 %v231, 64
      %v306 = vpop.permute.xlu0 %305
      %307 = vrot.lane.b32.xlu0 %v234, 64
      %v308 = vpop.permute.xlu0 %307
      %309 = vrot.lane.b32.xlu0 %v237, 64
      %v310 = vpop.permute.xlu0 %309
      %311 = vrot.lane.b32.xlu0 %v240, 64
      %v312 = vpop.permute.xlu0 %311
      %313 = vrot.lane.b32.xlu0 %v243, 64
      %v314 = vpop.permute.xlu0 %313
      %315 = vrot.lane.b32.xlu0 %v246, 64
      %v316 = vpop.permute.xlu0 %315
      %317 = vrot.lane.b32.xlu0 0.0, 64
      %v318 = vpop.permute.xlu0 %317
      %v327 = vadd.f32 %v225, %v304
      %v328 = vadd.f32 %v228, %v306
      %v329 = vadd.f32 %v231, %v308
      %v330 = vadd.f32 %v234, %v310
      %v331 = vadd.f32 %v237, %v312
      %v332 = vadd.f32 %v240, %v314
      %v333 = vadd.f32 %v243, %v316
      %v334 = vadd.f32 %v246, %v318
      %v335 = vlaneseq
      %v336 = vshrl.u32 %v335, 7
      %v337 = vadd.s32 %v336, 8
      %v338 = vadd.s32 %v336, 16
      %v339 = vadd.s32 %v336, 24
      %v340 = vadd.s32 %v336, 32
      %v341 = vadd.s32 %v336, 40
      %v342 = vadd.s32 %v336, 48
      %v343 = vadd.s32 %v336, 56
      %vm344 = vcmp.lt.s32.totalorder %v336, 0
      %v345 = vsub.s32 0, %v336
      %v346 = vsel %vm344, %v345, %v336
      %v347 = vshrl.u32 %v346, 3
      %v348 = vand.u32 %v346, 7
      %v349 = vsub.s32 0, %v348
      %v350 = vsel %vm344, %v349, %v348
      %vm351 = vcmp.lt.s32.totalorder %v337, 0
      %v352 = vsub.s32 0, %v337
      %v353 = vsel %vm351, %v352, %v337
      %v354 = vshrl.u32 %v353, 3
      %v355 = vand.u32 %v353, 7
      %v356 = vsub.s32 0, %v355
      %v357 = vsel %vm351, %v356, %v355
      %vm358 = vcmp.lt.s32.totalorder %v338, 0
      %v359 = vsub.s32 0, %v338
      %v360 = vsel %vm358, %v359, %v338
      %v361 = vshrl.u32 %v360, 3
      %v362 = vand.u32 %v360, 7
      %v363 = vsub.s32 0, %v362
      %v364 = vsel %vm358, %v363, %v362
      %vm365 = vcmp.lt.s32.totalorder %v339, 0
      %v366 = vsub.s32 0, %v339
      %v367 = vsel %vm365, %v366, %v339
      %v368 = vshrl.u32 %v367, 3
      %v369 = vand.u32 %v367, 7
      %v370 = vsub.s32 0, %v369
      %v371 = vsel %vm365, %v370, %v369
      %vm372 = vcmp.lt.s32.totalorder %v340, 0
      %v373 = vsub.s32 0, %v340
      %v374 = vsel %vm372, %v373, %v340
      %v375 = vshrl.u32 %v374, 3
      %v376 = vand.u32 %v374, 7
      %v377 = vsub.s32 0, %v376
      %v378 = vsel %vm372, %v377, %v376
      %vm379 = vcmp.lt.s32.totalorder %v341, 0
      %v380 = vsub.s32 0, %v341
      %v381 = vsel %vm379, %v380, %v341
      %v382 = vshrl.u32 %v381, 3
      %v383 = vand.u32 %v381, 7
      %v384 = vsub.s32 0, %v383
      %v385 = vsel %vm379, %v384, %v383
      %vm386 = vcmp.lt.s32.totalorder %v342, 0
      %v387 = vsub.s32 0, %v342
      %v388 = vsel %vm386, %v387, %v342
      %v389 = vshrl.u32 %v388, 3
      %v390 = vand.u32 %v388, 7
      %v391 = vsub.s32 0, %v390
      %v392 = vsel %vm386, %v391, %v390
      %vm393 = vcmp.lt.s32.totalorder %v343, 0
      %v394 = vsub.s32 0, %v343
      %v395 = vsel %vm393, %v394, %v343
      %v396 = vshrl.u32 %v395, 3
      %v397 = vand.u32 %v395, 7
      %v398 = vsub.s32 0, %v397
      %v399 = vsel %vm393, %v398, %v397
      %vm400 = vcmp.ne.s32.totalorder %v350, 0
      %vm401 = vcmp.ne.s32.totalorder %v357, 0
      %vm402 = vcmp.ne.s32.totalorder %v364, 0
      %vm403 = vcmp.ne.s32.totalorder %v371, 0
      %vm404 = vcmp.ne.s32.totalorder %v378, 0
      %vm405 = vcmp.ne.s32.totalorder %v385, 0
      %vm406 = vcmp.ne.s32.totalorder %v392, 0
      %vm407 = vcmp.ne.s32.totalorder %v399, 0
      %vm408 = vcmp.lt.s32.totalorder %v350, 0
      %vm409 = vcmp.lt.s32.totalorder %v357, 0
      %vm410 = vcmp.lt.s32.totalorder %v364, 0
      %vm411 = vcmp.lt.s32.totalorder %v371, 0
      %vm412 = vcmp.lt.s32.totalorder %v378, 0
      %vm413 = vcmp.lt.s32.totalorder %v385, 0
      %vm414 = vcmp.lt.s32.totalorder %v392, 0
      %vm415 = vcmp.lt.s32.totalorder %v399, 0
      %vm416 = vmand %vm408, %vm400
      %vm417 = vmand %vm409, %vm401
      %vm418 = vmand %vm410, %vm402
      %vm419 = vmand %vm411, %vm403
      %vm420 = vmand %vm412, %vm404
      %vm421 = vmand %vm413, %vm405
      %vm422 = vmand %vm414, %vm406
      %vm423 = vmand %vm415, %vm407
      %v424 = vadd.s32 %v350, 8
      %v425 = vadd.s32 %v357, 8
      %v426 = vadd.s32 %v364, 8
      %v427 = vadd.s32 %v371, 8
      %v428 = vadd.s32 %v378, 8
      %v429 = vadd.s32 %v385, 8
      %v430 = vadd.s32 %v392, 8
      %v431 = vadd.s32 %v399, 8
      %v432 = vsel %vm416, %v424, %v350
      %v433 = vsel %vm417, %v425, %v357
      %v434 = vsel %vm418, %v426, %v364
      %v435 = vsel %vm419, %v427, %v371
      %v436 = vsel %vm420, %v428, %v378
      %v437 = vsel %vm421, %v429, %v385
      %v438 = vsel %vm422, %v430, %v392
      %v439 = vsel %vm423, %v431, %v399
      %vm440 = vcmp.ne.s32.totalorder %v432, 0
      %vm441 = vcmp.ne.s32.totalorder %v433, 0
      %vm442 = vcmp.ne.s32.totalorder %v434, 0
      %vm443 = vcmp.ne.s32.totalorder %v435, 0
      %vm444 = vcmp.ne.s32.totalorder %v436, 0
      %vm445 = vcmp.ne.s32.totalorder %v437, 0
      %vm446 = vcmp.ne.s32.totalorder %v438, 0
      %vm447 = vcmp.ne.s32.totalorder %v439, 0
      %vm448 = vcmp.ne.s32.totalorder %v432, 7
      %vm449 = vcmp.ne.s32.totalorder %v433, 7
      %vm450 = vcmp.ne.s32.totalorder %v434, 7
      %vm451 = vcmp.ne.s32.totalorder %v435, 7
      %vm452 = vcmp.ne.s32.totalorder %v436, 7
      %vm453 = vcmp.ne.s32.totalorder %v437, 7
      %vm454 = vcmp.ne.s32.totalorder %v438, 7
      %vm455 = vcmp.ne.s32.totalorder %v439, 7
      %vm464 = vcmask 1040384
      %v465 = vrot.slane %v294, 7
      %v466 = vrot.slane %v295, 7
      %v467 = vsel %vm464, %v465, %v466
      %v468 = vrot.slane %v296, 7
      %v469 = vsel %vm464, %v466, %v468
      %v470 = vrot.slane %v297, 7
      %v471 = vsel %vm464, %v468, %v470
      %v472 = vrot.slane %v298, 7
      %v473 = vsel %vm464, %v470, %v472
      %v474 = vrot.slane %v299, 7
      %v475 = vsel %vm464, %v472, %v474
      %v476 = vrot.slane %v300, 7
      %v477 = vsel %vm464, %v474, %v476
      %v478 = vrot.slane %v301, 7
      %v479 = vsel %vm464, %v476, %v478
      %480 = vrot.lane.b32.xlu0 %v465, 72
      %v481 = vpop.permute.xlu0 %480
      %482 = vrot.lane.b32.xlu0 %v467, 72
      %v483 = vpop.permute.xlu0 %482
      %484 = vrot.lane.b32.xlu0 %v469, 72
      %v485 = vpop.permute.xlu0 %484
      %486 = vrot.lane.b32.xlu0 %v471, 72
      %v487 = vpop.permute.xlu0 %486
      %488 = vrot.lane.b32.xlu0 %v473, 72
      %v489 = vpop.permute.xlu0 %488
      %490 = vrot.lane.b32.xlu0 %v475, 72
      %v491 = vpop.permute.xlu0 %490
      %492 = vrot.lane.b32.xlu0 %v477, 72
      %v493 = vpop.permute.xlu0 %492
      %494 = vrot.lane.b32.xlu0 %v479, 72
      %v495 = vpop.permute.xlu0 %494
      %v504 = vsel %vm464, 0.0, %v481
      %v505 = vsel %vm440, %v504, 0.0
      %v506 = vsel %vm441, %v483, 0.0
      %v507 = vsel %vm442, %v485, 0.0
      %v508 = vsel %vm443, %v487, 0.0
      %v509 = vsel %vm444, %v489, 0.0
      %v510 = vsel %vm445, %v491, 0.0
      %v511 = vsel %vm446, %v493, 0.0
      %v512 = vsel %vm447, %v495, 0.0
      %521 = vrot.lane.b32.xlu0 %v505, 40
      %v522 = vpop.permute.xlu0 %521
      %523 = vrot.lane.b32.xlu0 %v506, 40
      %v524 = vpop.permute.xlu0 %523
      %525 = vrot.lane.b32.xlu0 %v507, 40
      %v526 = vpop.permute.xlu0 %525
      %527 = vrot.lane.b32.xlu0 %v508, 40
      %v528 = vpop.permute.xlu0 %527
      %529 = vrot.lane.b32.xlu0 %v509, 40
      %v530 = vpop.permute.xlu0 %529
      %531 = vrot.lane.b32.xlu0 %v510, 40
      %v532 = vpop.permute.xlu0 %531
      %533 = vrot.lane.b32.xlu0 %v511, 40
      %v534 = vpop.permute.xlu0 %533
      %535 = vrot.lane.b32.xlu0 %v512, 40
      %v536 = vpop.permute.xlu0 %535
      %v545 = vadd.f32 %v294, %v522
      %v546 = vadd.f32 %v295, %v524
      %v547 = vadd.f32 %v296, %v526
      %v548 = vadd.f32 %v297, %v528
      %v549 = vadd.f32 %v298, %v530
      %v550 = vadd.f32 %v299, %v532
      %v551 = vadd.f32 %v300, %v534
      %v552 = vadd.f32 %v301, %v536
      %vm553 = vcmask 1046528
      %v554 = vrot.slane %v294, 1
      %v555 = vrot.slane %v295, 1
      %v556 = vsel %vm553, %v554, %v555
      %v557 = vrot.slane %v296, 1
      %v558 = vsel %vm553, %v555, %v557
      %v559 = vrot.slane %v297, 1
      %v560 = vsel %vm553, %v557, %v559
      %v561 = vrot.slane %v298, 1
      %v562 = vsel %vm553, %v559, %v561
      %v563 = vrot.slane %v299, 1
      %v564 = vsel %vm553, %v561, %v563
      %v565 = vrot.slane %v300, 1
      %v566 = vsel %vm553, %v563, %v565
      %v567 = vrot.slane %v301, 1
      %v568 = vsel %vm553, %v565, %v567
      %v577 = vsel %vm553, %v567, 0.0
      %v578 = vsel %vm448, %v556, 0.0
      %v579 = vsel %vm449, %v558, 0.0
      %v580 = vsel %vm450, %v560, 0.0
      %v581 = vsel %vm451, %v562, 0.0
      %v582 = vsel %vm452, %v564, 0.0
      %v583 = vsel %vm453, %v566, 0.0
      %v584 = vsel %vm454, %v568, 0.0
      %v585 = vsel %vm455, %v577, 0.0
      %594 = vrot.lane.b32.xlu0 %v578, 16
      %v595 = vpop.permute.xlu0 %594
      %596 = vrot.lane.b32.xlu0 %v579, 16
      %v597 = vpop.permute.xlu0 %596
      %598 = vrot.lane.b32.xlu0 %v580, 16
      %v599 = vpop.permute.xlu0 %598
      %600 = vrot.lane.b32.xlu0 %v581, 16
      %v601 = vpop.permute.xlu0 %600
      %602 = vrot.lane.b32.xlu0 %v582, 16
      %v603 = vpop.permute.xlu0 %602
      %604 = vrot.lane.b32.xlu0 %v583, 16
      %v605 = vpop.permute.xlu0 %604
      %606 = vrot.lane.b32.xlu0 %v584, 16
      %v607 = vpop.permute.xlu0 %606
      %608 = vrot.lane.b32.xlu0 %v585, 16
      %v609 = vpop.permute.xlu0 %608
      %v618 = vadd.f32 %v294, %v595
      %v619 = vadd.f32 %v295, %v597
      %v620 = vadd.f32 %v296, %v599
      %v621 = vadd.f32 %v297, %v601
      %v622 = vadd.f32 %v298, %v603
      %v623 = vadd.f32 %v299, %v605
      %v624 = vadd.f32 %v300, %v607
      %v625 = vadd.f32 %v301, %v609
      %v634 = vrot.slane %v327, 7
      %v635 = vrot.slane %v328, 7
      %v636 = vsel %vm464, %v634, %v635
      %v637 = vrot.slane %v329, 7
      %v638 = vsel %vm464, %v635, %v637
      %v639 = vrot.slane %v330, 7
      %v640 = vsel %vm464, %v637, %v639
      %v641 = vrot.slane %v331, 7
      %v642 = vsel %vm464, %v639, %v641
      %v643 = vrot.slane %v332, 7
      %v644 = vsel %vm464, %v641, %v643
      %v645 = vrot.slane %v333, 7
      %v646 = vsel %vm464, %v643, %v645
      %v647 = vrot.slane %v334, 7
      %v648 = vsel %vm464, %v645, %v647
      %649 = vrot.lane.b32.xlu0 %v634, 40
      %v650 = vpop.permute.xlu0 %649
      %651 = vrot.lane.b32.xlu0 %v636, 40
      %v652 = vpop.permute.xlu0 %651
      %653 = vrot.lane.b32.xlu0 %v638, 40
      %v654 = vpop.permute.xlu0 %653
      %655 = vrot.lane.b32.xlu0 %v640, 40
      %v656 = vpop.permute.xlu0 %655
      %657 = vrot.lane.b32.xlu0 %v642, 40
      %v658 = vpop.permute.xlu0 %657
      %659 = vrot.lane.b32.xlu0 %v644, 40
      %v660 = vpop.permute.xlu0 %659
      %661 = vrot.lane.b32.xlu0 %v646, 40
      %v662 = vpop.permute.xlu0 %661
      %663 = vrot.lane.b32.xlu0 %v648, 40
      %v664 = vpop.permute.xlu0 %663
      %v673 = vsel %vm464, 0.0, %v650
      %v674 = vsel %vm440, %v673, 0.0
      %v675 = vsel %vm441, %v652, 0.0
      %v676 = vsel %vm442, %v654, 0.0
      %v677 = vsel %vm443, %v656, 0.0
      %v678 = vsel %vm444, %v658, 0.0
      %v679 = vsel %vm445, %v660, 0.0
      %v680 = vsel %vm446, %v662, 0.0
      %v681 = vsel %vm447, %v664, 0.0
      %690 = vrot.lane.b32.xlu0 %v674, 72
      %v691 = vpop.permute.xlu0 %690
      %692 = vrot.lane.b32.xlu0 %v675, 72
      %v693 = vpop.permute.xlu0 %692
      %694 = vrot.lane.b32.xlu0 %v676, 72
      %v695 = vpop.permute.xlu0 %694
      %696 = vrot.lane.b32.xlu0 %v677, 72
      %v697 = vpop.permute.xlu0 %696
      %698 = vrot.lane.b32.xlu0 %v678, 72
      %v699 = vpop.permute.xlu0 %698
      %700 = vrot.lane.b32.xlu0 %v679, 72
      %v701 = vpop.permute.xlu0 %700
      %702 = vrot.lane.b32.xlu0 %v680, 72
      %v703 = vpop.permute.xlu0 %702
      %704 = vrot.lane.b32.xlu0 %v681, 72
      %v705 = vpop.permute.xlu0 %704
      %v714 = vadd.f32 %v327, %v691
      %v715 = vadd.f32 %v328, %v693
      %v716 = vadd.f32 %v329, %v695
      %v717 = vadd.f32 %v330, %v697
      %v718 = vadd.f32 %v331, %v699
      %v719 = vadd.f32 %v332, %v701
      %v720 = vadd.f32 %v333, %v703
      %v721 = vadd.f32 %v334, %v705
      %v722 = vrot.slane %v327, 1
      %v723 = vrot.slane %v328, 1
      %v724 = vsel %vm553, %v722, %v723
      %v725 = vrot.slane %v329, 1
      %v726 = vsel %vm553, %v723, %v725
      %v727 = vrot.slane %v330, 1
      %v728 = vsel %vm553, %v725, %v727
      %v729 = vrot.slane %v331, 1
      %v730 = vsel %vm553, %v727, %v729
      %v731 = vrot.slane %v332, 1
      %v732 = vsel %vm553, %v729, %v731
      %v733 = vrot.slane %v333, 1
      %v734 = vsel %vm553, %v731, %v733
      %v735 = vrot.slane %v334, 1
      %v736 = vsel %vm553, %v733, %v735
      %v745 = vsel %vm553, %v735, 0.0
      %v746 = vsel %vm448, %v724, 0.0
      %v747 = vsel %vm449, %v726, 0.0
      %v748 = vsel %vm450, %v728, 0.0
      %v749 = vsel %vm451, %v730, 0.0
      %v750 = vsel %vm452, %v732, 0.0
      %v751 = vsel %vm453, %v734, 0.0
      %v752 = vsel %vm454, %v736, 0.0
      %v753 = vsel %vm455, %v745, 0.0
      %762 = vrot.lane.b32.xlu0 %v746, 16
      %v763 = vpop.permute.xlu0 %762
      %764 = vrot.lane.b32.xlu0 %v747, 16
      %v765 = vpop.permute.xlu0 %764
      %766 = vrot.lane.b32.xlu0 %v748, 16
      %v767 = vpop.permute.xlu0 %766
      %768 = vrot.lane.b32.xlu0 %v749, 16
      %v769 = vpop.permute.xlu0 %768
      %770 = vrot.lane.b32.xlu0 %v750, 16
      %v771 = vpop.permute.xlu0 %770
      %772 = vrot.lane.b32.xlu0 %v751, 16
      %v773 = vpop.permute.xlu0 %772
      %774 = vrot.lane.b32.xlu0 %v752, 16
      %v775 = vpop.permute.xlu0 %774
      %776 = vrot.lane.b32.xlu0 %v753, 16
      %v777 = vpop.permute.xlu0 %776
      %v786 = vadd.f32 %v327, %v763
      %v787 = vadd.f32 %v328, %v765
      %v788 = vadd.f32 %v329, %v767
      %v789 = vadd.f32 %v330, %v769
      %v790 = vadd.f32 %v331, %v771
      %v791 = vadd.f32 %v332, %v773
      %v792 = vadd.f32 %v333, %v775
      %v793 = vadd.f32 %v334, %v777
      %v795 = vperm.slane %v173, 0
      %796 = vrot.lane.b32.xlu0 %v795, 40
      %v797 = vpop.permute.xlu0 %796
      %v799 = vadd.f32 %v545, %v797
      %v800 = vadd.f32 %v546, %v797
      %v801 = vadd.f32 %v547, %v797
      %v802 = vadd.f32 %v548, %v797
      %v803 = vadd.f32 %v549, %v797
      %v804 = vadd.f32 %v550, %v797
      %v805 = vadd.f32 %v551, %v797
      %v806 = vadd.f32 %v552, %v797
      %807 = vrot.lane.b32.xlu0 %v795, 48
      %v808 = vpop.permute.xlu0 %807
      %v810 = vadd.f32 %v618, %v808
      %v811 = vadd.f32 %v619, %v808
      %v812 = vadd.f32 %v620, %v808
      %v813 = vadd.f32 %v621, %v808
      %v814 = vadd.f32 %v622, %v808
      %v815 = vadd.f32 %v623, %v808
      %v816 = vadd.f32 %v624, %v808
      %v817 = vadd.f32 %v625, %v808
      %818 = vrot.lane.b32.xlu0 %v795, 72
      %v819 = vpop.permute.xlu0 %818
      %v821 = vadd.f32 %v714, %v819
      %v822 = vadd.f32 %v715, %v819
      %v823 = vadd.f32 %v716, %v819
      %v824 = vadd.f32 %v717, %v819
      %v825 = vadd.f32 %v718, %v819
      %v826 = vadd.f32 %v719, %v819
      %v827 = vadd.f32 %v720, %v819
      %v828 = vadd.f32 %v721, %v819
      %829 = vrot.lane.b32.xlu0 %v795, 80
      %v830 = vpop.permute.xlu0 %829
      %v832 = vadd.f32 %v786, %v830
      %v833 = vadd.f32 %v787, %v830
      %v834 = vadd.f32 %v788, %v830
      %v835 = vadd.f32 %v789, %v830
      %v836 = vadd.f32 %v790, %v830
      %v837 = vadd.f32 %v791, %v830
      %v838 = vadd.f32 %v792, %v830
      %v839 = vadd.f32 %v793, %v830
      %848 = vrot.lane.b32.xlu0 %v799, 88
      %v849 = vpop.permute.xlu0 %848
      %850 = vrot.lane.b32.xlu0 %v800, 88
      %v851 = vpop.permute.xlu0 %850
      %852 = vrot.lane.b32.xlu0 %v801, 88
      %v853 = vpop.permute.xlu0 %852
      %854 = vrot.lane.b32.xlu0 %v802, 88
      %v855 = vpop.permute.xlu0 %854
      %856 = vrot.lane.b32.xlu0 %v803, 88
      %v857 = vpop.permute.xlu0 %856
      %858 = vrot.lane.b32.xlu0 %v804, 88
      %v859 = vpop.permute.xlu0 %858
      %860 = vrot.lane.b32.xlu0 %v805, 88
      %v861 = vpop.permute.xlu0 %860
      %862 = vrot.lane.b32.xlu0 %v806, 88
      %v863 = vpop.permute.xlu0 %862
      %880 = vrot.lane.b32.xlu0 %v810, 88
      %v881 = vpop.permute.xlu0 %880
      %882 = vrot.lane.b32.xlu0 %v811, 88
      %v883 = vpop.permute.xlu0 %882
      %884 = vrot.lane.b32.xlu0 %v812, 88
      %v885 = vpop.permute.xlu0 %884
      %886 = vrot.lane.b32.xlu0 %v813, 88
      %v887 = vpop.permute.xlu0 %886
      %888 = vrot.lane.b32.xlu0 %v814, 88
      %v889 = vpop.permute.xlu0 %888
      %890 = vrot.lane.b32.xlu0 %v815, 88
      %v891 = vpop.permute.xlu0 %890
      %892 = vrot.lane.b32.xlu0 %v816, 88
      %v893 = vpop.permute.xlu0 %892
      %894 = vrot.lane.b32.xlu0 %v817, 88
      %v895 = vpop.permute.xlu0 %894
      %912 = vrot.lane.b32.xlu0 %v821, 72
      %v913 = vpop.permute.xlu0 %912
      %914 = vrot.lane.b32.xlu0 %v822, 72
      %v915 = vpop.permute.xlu0 %914
      %916 = vrot.lane.b32.xlu0 %v823, 72
      %v917 = vpop.permute.xlu0 %916
      %918 = vrot.lane.b32.xlu0 %v824, 72
      %v919 = vpop.permute.xlu0 %918
      %920 = vrot.lane.b32.xlu0 %v825, 72
      %v921 = vpop.permute.xlu0 %920
      %922 = vrot.lane.b32.xlu0 %v826, 72
      %v923 = vpop.permute.xlu0 %922
      %924 = vrot.lane.b32.xlu0 %v827, 72
      %v925 = vpop.permute.xlu0 %924
      %926 = vrot.lane.b32.xlu0 %v828, 72
      %v927 = vpop.permute.xlu0 %926
      %944 = vrot.lane.b32.xlu0 %v832, 72
      %v945 = vpop.permute.xlu0 %944
      %946 = vrot.lane.b32.xlu0 %v833, 72
      %v947 = vpop.permute.xlu0 %946
      %948 = vrot.lane.b32.xlu0 %v834, 72
      %v949 = vpop.permute.xlu0 %948
      %950 = vrot.lane.b32.xlu0 %v835, 72
      %v951 = vpop.permute.xlu0 %950
      %952 = vrot.lane.b32.xlu0 %v836, 72
      %v953 = vpop.permute.xlu0 %952
      %954 = vrot.lane.b32.xlu0 %v837, 72
      %v955 = vpop.permute.xlu0 %954
      %956 = vrot.lane.b32.xlu0 %v838, 72
      %v957 = vpop.permute.xlu0 %956
      %958 = vrot.lane.b32.xlu0 %v839, 72
      %v959 = vpop.permute.xlu0 %958
      %vm968 = vcmask 64512
      %v969 = vsel %vm968, %v849, %v881
      %v970 = vsel %vm968, %v851, %v883
      %v971 = vsel %vm968, %v853, %v885
      %v972 = vsel %vm968, %v855, %v887
      %v973 = vsel %vm968, %v857, %v889
      %v974 = vsel %vm968, %v859, %v891
      %v975 = vsel %vm968, %v861, %v893
      %v976 = vsel %vm968, %v863, %v895
      %v977 = vsel %vm182, %v969, %v913
      %v978 = vsel %vm182, %v970, %v915
      %v979 = vsel %vm182, %v971, %v917
      %v980 = vsel %vm182, %v972, %v919
      %v981 = vsel %vm182, %v973, %v921
      %v982 = vsel %vm182, %v974, %v923
      %v983 = vsel %vm182, %v975, %v925
      %v984 = vsel %vm182, %v976, %v927
      %vm985 = vcmask 195584
      %v986 = vsel %vm985, %v977, %v945
      %v987 = vsel %vm985, %v978, %v947
      %v988 = vsel %vm985, %v979, %v949
      %v989 = vsel %vm985, %v980, %v951
      %v990 = vsel %vm985, %v981, %v953
      %v991 = vsel %vm985, %v982, %v955
      %v992 = vsel %vm985, %v983, %v957
      %v993 = vsel %vm985, %v984, %v959
      %vm994 = vcmask 261120
      %995 = vst.msk [vmem:[%s170] sm:$0xff] %vm994, %v986
      %996 = vst.msk [vmem:[%s170 + $0x8] sm:$0xff] %vm994, %v987
      %997 = vst.msk [vmem:[%s170 + $0x10] sm:$0xff] %vm994, %v988
      %998 = vst.msk [vmem:[%s170 + $0x18] sm:$0xff] %vm994, %v989
      %999 = vst.msk [vmem:[%s170 + $0x20] sm:$0xff] %vm994, %v990
      %1000 = vst.msk [vmem:[%s170 + $0x28] sm:$0xff] %vm994, %v991
      %1001 = vst.msk [vmem:[%s170 + $0x30] sm:$0xff] %vm994, %v992
      %1002 = vst.msk [vmem:[%s170 + $0x38] sm:$0xff] %vm994, %v993
      %p1003 = scmp.lt.s32.totalorder %s14, 1
      %s1004 = scalar_select %p1003, %s14, 1
      %s1005 = smul.addr %s1004, 8
      %s1006 = smul.addr %s1005, 8
      %s1007 = scalar_lea.vmem %s3, %s1006
      // Predicated region
      $region33: #{tpu_custom_call.1} parent=31 // pred_check
        %p1008 = pneg %p100
      $region34: #{tpu_custom_call.1} parent=31 // pred_check_branch
        %1010 = sbr.rel (%p1008) target = $region36
      $region35: #{tpu_custom_call.1} parent=31 // pred_region
        _
      $region36: #{tpu_custom_call.1} parent=31 // pred_fallthru
        _
    $region32: #{tpu_custom_call.1} parent=5 // pred_fallthru
      _
    %p1011 = scmp.le.s32.totalorder 2, %s9
    // Predicated region
    $region37: #{tpu_custom_call.1} parent=5 // pred_check
      %p1012 = pneg %p1011
    $region38: #{tpu_custom_call.1} parent=5 // pred_check_branch
      %1014 = sbr.rel (%p1012) target = $region40
    $region39: #{tpu_custom_call.1} parent=5 // pred_region
      %s1015 = ssub.s32 %s9, 2
      // Predicated region
      $region41: #{tpu_custom_call.1} parent=39 // pred_check
        %p1016 = pneg %p106
      $region42: #{tpu_custom_call.1} parent=39 // pred_check_branch
        %1018 = sbr.rel (%p1016) target = $region44
      $region43: #{tpu_custom_call.1} parent=39 // pred_region
        %p1019 = scmp.lt.s32.totalorder %s15, 1
        %s1020 = scalar_select %p1019, %s15, 1
        %s1021 = smul.addr %s1020, 8
        %s1022 = smul.addr %s1021, 8
        %s1023 = scalar_lea.vmem %s3, %s1022
      $region44: #{tpu_custom_call.1} parent=39 // pred_fallthru
        _
    $region40: #{tpu_custom_call.1} parent=5 // pred_fallthru
      _
  $region6: #{tpu_custom_call.1} parent=0 // loop_footer
    %s13 = sadd.s32 1, %s9
  $region7: #{tpu_custom_call.1} parent=0 // loop_footer_branch
    %8 = sbr.rel target = $region3
  $region8: #{tpu_custom_call.1} parent=0 // loop_exit
    _

</llo_original>
